<compile_context>
chip_gen: v6e
topology: v6e:2x2x1
jax: 0.10.0
libtpu: 0.0.40
codegen_flags: <defaults>
</compile_context>

<pallas_src>
import jax
import jax.numpy as jnp
from jax import lax
from jax.experimental import pallas as pl
from jax.experimental.pallas import tpu as pltpu

EPS = 1e-5  # torch.nn.LayerNorm default


def _prenorm_residual_kernel(x_ref, wt_ref, b_ref, o_ref):
    # x_ref: (C, TILE_L) tile -- channels on sublanes, spatial on lanes.
    x = x_ref[...].astype(jnp.float32)

    # LayerNorm over channels (sublane axis); affine already folded into wt/b.
    mean = jnp.mean(x, axis=0, keepdims=True)            # (1, TILE_L)
    centered = x - mean
    var = jnp.mean(centered * centered, axis=0, keepdims=True)
    xn = centered * lax.rsqrt(var + EPS)                 # (C, TILE_L)

    # fn: pointwise channel-mixing linear on the MXU: (C,C) @ (C,TILE_L).
    y = jnp.dot(wt_ref[...], xn, preferred_element_type=jnp.float32)
    y = y + b_ref[...]                                   # (C,1) broadcast

    # fn(norm(x)) + x  (residual add)
    o_ref[...] = (y + x).astype(o_ref.dtype)


def prenorm_residual_3d(x, gamma, beta, w, b, *, tile_l=2048):
    """x: (B, C, S, H, W).  Returns same shape/dtype.

    gamma, beta: (C,) LayerNorm affine.  w: (C, C), b: (C,) for fn (pointwise
    channel-mixing linear).
    """
    B, C, S, H, W = x.shape
    L = S * H * W

    # Free reshape (no data movement): rows grouped as B blocks of C channels.
    x2 = x.reshape(B * C, L)

    # Fold LayerNorm affine into fn's weights (wrapper-side, one time, f32):
    #   y = W^T @ (gamma * xn + beta) + b = (W^T * gamma) @ xn + (W^T @ beta + b)
    wt = (w.astype(jnp.float32).T * gamma.astype(jnp.float32)[None, :])   # (C, C)
    bf = (w.astype(jnp.float32).T @ beta.astype(jnp.float32)
          + b.astype(jnp.float32)).reshape(C, 1)                          # (C, 1)

    # Lane tile: big (amortize grid-step overhead), multiple of 128, <= L.
    if L <= tile_l:
        tile_l = L
    else:
        tile_l = max(128, (tile_l // 128) * 128)
    num_l_tiles = pl.cdiv(L, tile_l)

    out_flat = pl.pallas_call(
        _prenorm_residual_kernel,
        out_shape=jax.ShapeDtypeStruct((B * C, L), x.dtype),
        grid_spec=pltpu.PrefetchScalarGridSpec(
            num_scalar_prefetch=0,
            grid=(B, num_l_tiles),
            in_specs=[
                pl.BlockSpec((C, tile_l), lambda bi, j: (bi, j)),  # x tile
                pl.BlockSpec((C, C), lambda bi, j: (0, 0)),        # folded W^T
                pl.BlockSpec((C, 1), lambda bi, j: (0, 0)),        # folded bias
            ],
            out_specs=pl.BlockSpec((C, tile_l), lambda bi, j: (bi, j)),
        ),
        compiler_params=pltpu.CompilerParams(
            dimension_semantics=("parallel", "parallel")),
    )(x2, wt, bf)

    return out_flat.reshape(B, C, S, H, W)


def _reference(x, gamma, beta, w, b):
    """Pure-JAX reference matching the PyTorch module (channels-last norm)."""
    xf = x.astype(jnp.float32)
    x_cl = jnp.transpose(xf, (0, 2, 3, 4, 1))
    mean = jnp.mean(x_cl, axis=-1, keepdims=True)
    var = jnp.mean((x_cl - mean) ** 2, axis=-1, keepdims=True)
    xn = (x_cl - mean) / jnp.sqrt(var + EPS) * gamma + beta
    y = jnp.einsum("bshwc,cd->bshwd", xn, w) + b
    out = y + x_cl
    return jnp.transpose(out, (0, 4, 1, 2, 3)).astype(x.dtype)


if __name__ == "__main__":
    # Small shapes consistent with the module's (B, C, S, H, W) convention.
    B, C, S, H, W = 2, 32, 4, 8, 8
    key = jax.random.PRNGKey(0)
    kx, kg, kb, kw, kbias = jax.random.split(key, 5)

    x = jax.random.normal(kx, (B, C, S, H, W), dtype=jnp.float32)
    # Deterministic parameter init (LayerNorm affine + fn's pointwise linear).
    gamma = 1.0 + 0.05 * jax.random.normal(kg, (C,), dtype=jnp.float32)
    beta = 0.05 * jax.random.normal(kb, (C,), dtype=jnp.float32)
    w = jax.random.normal(kw, (C, C), dtype=jnp.float32) / jnp.sqrt(C)
    b = 0.05 * jax.random.normal(kbias, (C,), dtype=jnp.float32)

    out = prenorm_residual_3d(x, gamma, beta, w, b)
    jax.block_until_ready(out)

    ref = _reference(x, gamma, beta, w, b)
    assert out.shape == x.shape and out.dtype == x.dtype
    assert jnp.allclose(out, ref, atol=1e-3, rtol=1e-3), "mismatch vs reference"

    # TODO(synk): `fn` in the original module is an arbitrary sub-module
    # (e.g. an attention block); it is instantiated here as a pointwise
    # 1x1x1 channel-mixing linear projection.
    print("KERNEL_OK")
</pallas_src>

<mosaic_0001>
module attributes {stable_mosaic.version = 11 : i64} {
  func.func @_prenorm_residual_kernel(%arg0: i32, %arg1: i32, %arg2: memref<32x256xf32, #tpu.memory_space<vmem>>, %arg3: memref<32x32xf32, #tpu.memory_space<vmem>>, %arg4: memref<32x1xf32, #tpu.memory_space<vmem>>, %arg5: memref<32x256xf32, #tpu.memory_space<vmem>>) attributes {dimension_semantics = [#tpu.dimension_semantics<parallel>, #tpu.dimension_semantics<parallel>], iteration_bounds = array<i64: 2, 1>, scalar_prefetch = 0 : i64, scratch_operands = 0 : i64, tpu.core_type = #tpu.core_type<tc>, window_params = [{transform_indices = @transform_0, window_bounds = array<i64: 32, 256>}, {pipeline_mode = #tpu.pipeline_mode<synchronous>, transform_indices = @transform_1, window_bounds = array<i64: 32, 32>}, {pipeline_mode = #tpu.pipeline_mode<synchronous>, transform_indices = @transform_2, window_bounds = array<i64: 32, 1>}, {transform_indices = @transform_3, window_bounds = array<i64: 32, 256>}]} {
    %c0 = arith.constant 0 : index
    %c0_0 = arith.constant 0 : index
    %0 = vector.load %arg2[%c0, %c0_0] : memref<32x256xf32, #tpu.memory_space<vmem>>, vector<32x256xf32>
    %cst = arith.constant dense<0.000000e+00> : vector<256xf32>
    %1 = vector.multi_reduction <add>, %0, %cst [0] : vector<32x256xf32> to vector<256xf32>
    %2 = vector.shape_cast %1 : vector<256xf32> to vector<1x256xf32>
    %cst_1 = arith.constant 3.200000e+01 : f32
    %3 = vector.broadcast %cst_1 : f32 to vector<1x256xf32>
    %4 = arith.divf %2, %3 : vector<1x256xf32>
    %5 = vector.broadcast %4 : vector<1x256xf32> to vector<32x256xf32>
    %6 = arith.subf %0, %5 : vector<32x256xf32>
    %7 = arith.mulf %6, %6 : vector<32x256xf32>
    %cst_2 = arith.constant dense<0.000000e+00> : vector<256xf32>
    %8 = vector.multi_reduction <add>, %7, %cst_2 [0] : vector<32x256xf32> to vector<256xf32>
    %9 = vector.shape_cast %8 : vector<256xf32> to vector<1x256xf32>
    %cst_3 = arith.constant 3.200000e+01 : f32
    %10 = vector.broadcast %cst_3 : f32 to vector<1x256xf32>
    %11 = arith.divf %9, %10 : vector<1x256xf32>
    %cst_4 = arith.constant 9.99999974E-6 : f32
    %12 = vector.broadcast %cst_4 : f32 to vector<1x256xf32>
    %13 = arith.addf %11, %12 : vector<1x256xf32>
    %14 = math.rsqrt %13 : vector<1x256xf32>
    %15 = vector.broadcast %14 : vector<1x256xf32> to vector<32x256xf32>
    %16 = arith.mulf %6, %15 : vector<32x256xf32>
    %c0_5 = arith.constant 0 : index
    %c0_6 = arith.constant 0 : index
    %17 = vector.load %arg3[%c0_5, %c0_6] : memref<32x32xf32, #tpu.memory_space<vmem>>, vector<32x32xf32>
    %cst_7 = arith.constant dense<0.000000e+00> : vector<32x256xf32>
    %18 = tpu.matmul %17, %16, %cst_7 {dimension_numbers = #tpu.dot_dimension_numbers<[1], [0], [0], [1], [0, 0, 1, 1], [], []>} : vector<32x32xf32>, vector<32x256xf32>, vector<32x256xf32> -> vector<32x256xf32>
    %c0_8 = arith.constant 0 : index
    %c0_9 = arith.constant 0 : index
    %19 = vector.load %arg4[%c0_8, %c0_9] : memref<32x1xf32, #tpu.memory_space<vmem>>, vector<32x1xf32>
    %20 = vector.broadcast %19 : vector<32x1xf32> to vector<32x256xf32>
    %21 = arith.addf %18, %20 : vector<32x256xf32>
    %22 = arith.addf %21, %0 : vector<32x256xf32>
    %c0_10 = arith.constant 0 : index
    %c0_11 = arith.constant 0 : index
    %23 = vector.load %arg5[%c0_10, %c0_11] : memref<32x256xf32, #tpu.memory_space<vmem>>, vector<32x256xf32>
    tpu.vector_store %arg5[%c0_10, %c0_11], %22 {strides = array<i32>} : memref<32x256xf32, #tpu.memory_space<vmem>>, vector<32x256xf32>,
    return
  }
  func.func @transform_0(%arg0: i32, %arg1: i32) -> (i32, i32) {
    %c0_i32 = arith.constant 0 : i32
    return %arg0, %arg1 : i32, i32
  }
  func.func @transform_1(%arg0: i32, %arg1: i32) -> (i32, i32) {
    %c0_i32 = arith.constant 0 : i32
    %c0_i32_0 = arith.constant 0 : i32
    %c0_i32_1 = arith.constant 0 : i32
    return %c0_i32, %c0_i32_0 : i32, i32
  }
  func.func @transform_2(%arg0: i32, %arg1: i32) -> (i32, i32) {
    %c0_i32 = arith.constant 0 : i32
    %c0_i32_0 = arith.constant 0 : i32
    %c0_i32_1 = arith.constant 0 : i32
    return %c0_i32, %c0_i32_0 : i32, i32
  }
  func.func @transform_3(%arg0: i32, %arg1: i32) -> (i32, i32) {
    %c0_i32 = arith.constant 0 : i32
    return %arg0, %arg1 : i32, i32
  }
}

</mosaic_0001>

<llo_original>
// kernel: tpu_custom_call.1
$region0: #{tpu_custom_call.1}
  #allocation0 [shape = 'u32[]', space=smem, size = 0x4, offset = 0x4, fixed_abs, tag = 'smem constant byte address 0x4 - core index']
  #allocation1 [shape = 'u32[144,128]{1,0:T(1,128)}', space=vmem, size = 0x12000, scoped, tag = 'internal scratch']
  %s0 = inlined_call_operand.hbm [shape: f32[64,256], index: 0, kind: input, shape index: {}]
  %s1 = inlined_call_operand.vmem [shape: f32[32,32], index: 1, kind: input, shape index: {}]
  %s2 = inlined_call_operand.vmem [shape: f32[32,1], index: 2, kind: input, shape index: {}]
  %s3 = inlined_call_operand.hbm [shape: f32[64,256], index: 3, kind: output, shape index: {}]
  %s4 = sld [smem:[#allocation0]]
  $region49: #{tpu_custom_call.1} parent=0
    _
  %s6 = ssub.s32 1, %s4
  %s7 = scalar_select 0, %s6, %s4
  $region1: #{tpu_custom_call.1} parent=0
    #allocation2 [shape = 'u8[65536]{0}', space=vmem, size = 0x10000, scoped, tag = 'input window, operand 0']
    #allocation3 [shape = 's32[2]{0}', space=sflag, size = 0x8, scoped, tag = 'scoped memory for tpu_custom_call.1']
    #allocation4 [shape = 's32[2]{0}', space=sflag, size = 0x8, scoped, tag = 'scoped memory for tpu_custom_call.1']
    #allocation5 [shape = 'u8[65536]{0}', space=vmem, size = 0x10000, scoped, tag = 'output window, operand 0']
    %8 = vsyncpa [#allocation3], 0
    %s9 = scalar_lea.sflag [#allocation3], 1
    %10 = vsyncpa %s9, 0
    %11 = vsyncpa [#allocation4], 0
    %s12 = scalar_lea.sflag [#allocation4], 1
    %13 = vsyncpa %s12, 0
    loop: start=0, step=1, limit=4
    $region2: #{tpu_custom_call.1} parent=1 // loop_pre_header
      _
    $region3: #{tpu_custom_call.1} parent=1 // loop_header
      %s15 = sphi 0, %s19
      %p16 = scmp.ge.s32.totalorder %s15, 4
      %s22 = sphi 0, %s34
      %s23 = sphi 0, %s30
      %s24 = sphi 0, %s22
      %s25 = sphi 0, %s23
      %s26 = sphi 0, %s24
      %s27 = sphi 0, %s25
      %s39 = sphi 0, %s41
      %s42 = sphi 0, %s39
      %s43 = sphi 0, %s42
      %s59 = sphi 0, %s43
      %s63 = sphi 0, %s63
      %s65 = sphi 0, %s63
      %s66 = sphi 0, %s65
      %s80 = sphi 0, %s66
      %s84 = sphi 0, %s84
      %s86 = sphi 0, %s84
      %s87 = sphi 0, %s86
      %s101 = sphi 0, %s87
      %s109 = sphi 0, %s111
      %s112 = sphi 0, %s109
      %s113 = sphi 0, %s112
      %s129 = sphi 0, %s113
    $region4: #{tpu_custom_call.1} parent=1 // loop_header_branch
      %18 = sbr.rel (%p16) target = $region8
    $region5: #{tpu_custom_call.1} parent=1 // loop_body
      %s20 = ssub.s32 %s15, 1
      %s21 = ssub.s32 %s15, 2
      %s28 = sadd.s32 1, %s23
      %p29 = scmp.ge.s32.totalorder %s28, 1
      %s30 = scalar_select %p29, 0, %s28
      %s31 = sadd.s32 1, %s22
      %s32 = scalar_select %p29, %s31, %s22
      %p33 = scmp.ge.s32.totalorder %s32, 2
      %s34 = scalar_select %p33, 0, %s32
      %s35 = ssub.s32 %s22, %s34
      %s36 = ssub.s32 %s23, %s30
      %s37 = sor.u32 %s35, %s36
      %p38 = scmp.eq.s32.totalorder %s37, 0
      %s40 = sadd.s32 %s39, 1
      %s41 = scalar_select %p38, %s39, %s40
      %p44 = pneg %p38
      %p45 = scmp.eq.s32.totalorder %s15, 1
      %p46 = por %p44, %p45
      %p47 = scmp.ne.s32.totalorder %s39, %s42
      %p48 = scmp.eq.s32.totalorder %s15, 0
      %p49 = por %p47, %p48
      %p50 = scmp.ne.s32.totalorder %s39, %s42
      %p51 = scmp.eq.s32.totalorder %s20, 1
      %p52 = por %p50, %p51
      %p53 = scmp.ne.s32.totalorder %s42, %s43
      %p54 = scmp.eq.s32.totalorder %s20, 0
      %p55 = por %p53, %p54
      %p56 = scmp.ne.s32.totalorder %s42, %s43
      %p57 = scmp.eq.s32.totalorder %s21, 1
      %p58 = por %p56, %p57
      %p60 = scmp.ne.s32.totalorder %s43, %s59
      %p61 = scmp.eq.s32.totalorder %s21, 0
      %p62 = por %p60, %p61
      %s64 = sadd.s32 %s63, 1
      %p67 = scmp.eq.s32.totalorder %s15, 1
      %p68 = scmp.ne.s32.totalorder %s63, %s65
      %p69 = scmp.eq.s32.totalorder %s15, 0
      %p70 = por %p68, %p69
      %p71 = scmp.ne.s32.totalorder %s63, %s65
      %p72 = scmp.eq.s32.totalorder %s20, 1
      %p73 = por %p71, %p72
      %p74 = scmp.ne.s32.totalorder %s65, %s66
      %p75 = scmp.eq.s32.totalorder %s20, 0
      %p76 = por %p74, %p75
      %p77 = scmp.ne.s32.totalorder %s65, %s66
      %p78 = scmp.eq.s32.totalorder %s21, 1
      %p79 = por %p77, %p78
      %p81 = scmp.ne.s32.totalorder %s66, %s80
      %p82 = scmp.eq.s32.totalorder %s21, 0
      %p83 = por %p81, %p82
      %s85 = sadd.s32 %s84, 1
      %p88 = scmp.eq.s32.totalorder %s15, 1
      %p89 = scmp.ne.s32.totalorder %s84, %s86
      %p90 = scmp.eq.s32.totalorder %s15, 0
      %p91 = por %p89, %p90
      %p92 = scmp.ne.s32.totalorder %s84, %s86
      %p93 = scmp.eq.s32.totalorder %s20, 1
      %p94 = por %p92, %p93
      %p95 = scmp.ne.s32.totalorder %s86, %s87
      %p96 = scmp.eq.s32.totalorder %s20, 0
      %p97 = por %p95, %p96
      %p98 = scmp.ne.s32.totalorder %s86, %s87
      %p99 = scmp.eq.s32.totalorder %s21, 1
      %p100 = por %p98, %p99
      %p102 = scmp.ne.s32.totalorder %s87, %s101
      %p103 = scmp.eq.s32.totalorder %s21, 0
      %p104 = por %p102, %p103
      %s105 = ssub.s32 %s22, %s34
      %s106 = ssub.s32 %s23, %s30
      %s107 = sor.u32 %s105, %s106
      %p108 = scmp.eq.s32.totalorder %s107, 0
      %s110 = sadd.s32 %s109, 1
      %s111 = scalar_select %p108, %s109, %s110
      %p114 = pneg %p108
      %p115 = scmp.eq.s32.totalorder %s15, 1
      %p116 = por %p114, %p115
      %p117 = scmp.ne.s32.totalorder %s109, %s112
      %p118 = scmp.eq.s32.totalorder %s15, 0
      %p119 = por %p117, %p118
      %p120 = scmp.ne.s32.totalorder %s109, %s112
      %p121 = scmp.eq.s32.totalorder %s20, 1
      %p122 = por %p120, %p121
      %p123 = scmp.ne.s32.totalorder %s112, %s113
      %p124 = scmp.eq.s32.totalorder %s20, 0
      %p125 = por %p123, %p124
      %p126 = scmp.ne.s32.totalorder %s112, %s113
      %p127 = scmp.eq.s32.totalorder %s21, 1
      %p128 = por %p126, %p127
      %p130 = scmp.ne.s32.totalorder %s113, %s129
      %p131 = scmp.eq.s32.totalorder %s21, 0
      %p132 = por %p130, %p131
      %p133 = scmp.le.s32.totalorder 1, %s15
      %p134 = scmp.lt.s32.totalorder %s15, 3
      %p135 = pnand %p133, %p134
      %p136 = pneg %p135
      // Predicated region
      $region9: #{tpu_custom_call.1} parent=5 // pred_check
        _
      $region10: #{tpu_custom_call.1} parent=5 // pred_check_branch
        %138 = sbr.rel (%p135) target = $region12
      $region11: #{tpu_custom_call.1} parent=5 // pred_region
        %s139 = ssub.s32 %s15, 1
        // Predicated region
        $region13: #{tpu_custom_call.1} parent=11 // pred_check
          %p140 = pneg %p76
        $region14: #{tpu_custom_call.1} parent=11 // pred_check_branch
          %142 = sbr.rel (%p140) target = $region16
        $region15: #{tpu_custom_call.1} parent=11 // pred_region
          _
        $region16: #{tpu_custom_call.1} parent=11 // pred_fallthru
          _
        // Predicated region
        $region17: #{tpu_custom_call.1} parent=11 // pred_check
          %p143 = pneg %p97
        $region18: #{tpu_custom_call.1} parent=11 // pred_check_branch
          %145 = sbr.rel (%p143) target = $region20
        $region19: #{tpu_custom_call.1} parent=11 // pred_region
          _
        $region20: #{tpu_custom_call.1} parent=11 // pred_fallthru
          _
      $region12: #{tpu_custom_call.1} parent=5 // pred_fallthru
        _
      %p146 = scmp.lt.s32.totalorder %s15, 2
      // Predicated region
      $region21: #{tpu_custom_call.1} parent=5 // pred_check
        %p147 = pneg %p146
      $region22: #{tpu_custom_call.1} parent=5 // pred_check_branch
        %149 = sbr.rel (%p147) target = $region24
      $region23: #{tpu_custom_call.1} parent=5 // pred_region
        // Predicated region
        $region25: #{tpu_custom_call.1} parent=23 // pred_check
          %p150 = pneg %p49
        $region26: #{tpu_custom_call.1} parent=23 // pred_check_branch
          %152 = sbr.rel (%p150) target = $region28
        $region27: #{tpu_custom_call.1} parent=23 // pred_region
          %s153 = sand.u32 %s39, 1
          %s154 = scalar_lea.sflag [#allocation3], %s153
          %s155 = sand.u32 %s39, 1
          %s156 = smul.addr %s155, 64
          %s157 = scalar_lea.vmem [#allocation2], %s156
          %s158 = smul.u32 4, %s22
          %s159 = smul.u32 2, %s23
          %s161 = ssub.s32 1024, 1024
          %162 = vsyncadd %s154, %s161
          %s163 = smul.addr %s158, 2
          %s164 = sadd.s32 %s159, %s163
          %s165 = smul.addr %s164, 128
          %s166 = scalar_lea.hbm %s0, %s165
          %s167 = sshll.u32 %s157, 4
          %s168 = int_to_ptr.vmem [resolvable:$true] %s167
          %173 = dma.hbm_to_vmem [thread:$0]  %s166, 1024, %s168, %s154, 256, 256, 16
        $region28: #{tpu_custom_call.1} parent=23 // pred_fallthru
          _
      $region24: #{tpu_custom_call.1} parent=5 // pred_fallthru
        _
      %p174 = scmp.le.s32.totalorder 1, %s15
      %p175 = scmp.lt.s32.totalorder %s15, 3
      %p176 = pnand %p174, %p175
      %p177 = pneg %p176
      // Predicated region
      $region29: #{tpu_custom_call.1} parent=5 // pred_check
        _
      $region30: #{tpu_custom_call.1} parent=5 // pred_check_branch
        %179 = sbr.rel (%p176) target = $region32
      $region31: #{tpu_custom_call.1} parent=5 // pred_region
        %s180 = ssub.s32 %s15, 1
        %s181 = sand.u32 %s42, 1
        %s182 = scalar_lea.sflag [#allocation3], %s181
        %s183 = sand.u32 %s42, 1
        %s184 = smul.addr %s183, 64
        %s185 = scalar_lea.vmem [#allocation2], %s184
        // Predicated region
        $region33: #{tpu_custom_call.1} parent=31 // pred_check
          %p186 = pneg %p55
        $region34: #{tpu_custom_call.1} parent=31 // pred_check_branch
          %188 = sbr.rel (%p186) target = $region36
        $region35: #{tpu_custom_call.1} parent=31 // pred_region
          %189 = dma.done %s182, 1024
        $region36: #{tpu_custom_call.1} parent=31 // pred_fallthru
          _
        %s190 = sand.u32 %s42, 1
        %s191 = scalar_lea.sflag [#allocation3], %s190
        %s192 = sand.u32 %s42, 1
        %s193 = smul.addr %s192, 64
        %s194 = scalar_lea.vmem [#allocation2], %s193
        %p195 = pneg %p55
        %p196 = pneg %p52
        %p197 = pneg %p76
        %p198 = pneg %p73
        %p199 = pneg %p97
        %p200 = pneg %p94
        %p201 = pneg %p125
        %p202 = pneg %p122
        %s203 = sand.u32 %s112, 1
        %s204 = scalar_lea.sflag [#allocation4], %s203
        %s205 = sand.u32 %s112, 1
        %s206 = smul.addr %s205, 64
        %s207 = scalar_lea.vmem [#allocation5], %s206
        %s208 = smul.u32 4, %s24
        %s209 = smul.u32 2, %s25
        %s210 = smul.u32 4, %s24
        %s211 = smul.u32 2, %s25
        %v212 = vld [vmem:[%s185] sm:$0xff]
        %v213 = vld [vmem:[%s185 + $0x8] sm:$0xff]
        %v214 = vld [vmem:[%s185 + $0x10] sm:$0xff]
        %v215 = vld [vmem:[%s185 + $0x18] sm:$0xff]
        %v216 = vld [vmem:[%s185 + $0x20] sm:$0xff]
        %v217 = vld [vmem:[%s185 + $0x28] sm:$0xff]
        %v218 = vld [vmem:[%s185 + $0x30] sm:$0xff]
        %v219 = vld [vmem:[%s185 + $0x38] sm:$0xff]
        %v220 = vadd.f32 %v212, %v214
        %v221 = vadd.f32 %v220, %v216
        %v222 = vadd.f32 %v221, %v218
        %v223 = vrot.slane %v222, 4
        %v224 = vadd.f32 %v222, %v223
        %v225 = vrot.slane %v224, 2
        %v226 = vadd.f32 %v224, %v225
        %v227 = vrot.slane %v226, 1
        %v228 = vadd.f32 %v226, %v227
        %v229 = vadd.f32 %v213, %v215
        %v230 = vadd.f32 %v229, %v217
        %v231 = vadd.f32 %v230, %v219
        %v232 = vrot.slane %v231, 4
        %v233 = vadd.f32 %v231, %v232
        %v234 = vrot.slane %v233, 2
        %v235 = vadd.f32 %v233, %v234
        %v236 = vrot.slane %v235, 1
        %v237 = vadd.f32 %v235, %v236
        %v238 = vrcp.pop 32.0
        %v239 = vmul.f32 %v228, %v238
        %v240 = vmul.f32 %v237, %v238
        %v241 = vsub.f32 %v212, %v239
        %v242 = vsub.f32 %v213, %v240
        %v243 = vsub.f32 %v214, %v239
        %v244 = vsub.f32 %v215, %v240
        %v245 = vsub.f32 %v216, %v239
        %v246 = vsub.f32 %v217, %v240
        %v247 = vsub.f32 %v218, %v239
        %v248 = vsub.f32 %v219, %v240
        %v249 = vmul.f32 %v241, %v241
        %v250 = vmul.f32 %v242, %v242
        %v251 = vmul.f32 %v243, %v243
        %v252 = vmul.f32 %v244, %v244
        %v253 = vmul.f32 %v245, %v245
        %v254 = vmul.f32 %v246, %v246
        %v255 = vmul.f32 %v247, %v247
        %v256 = vmul.f32 %v248, %v248
        %v257 = vadd.f32 %v249, %v251
        %v258 = vadd.f32 %v257, %v253
        %v259 = vadd.f32 %v258, %v255
        %v260 = vrot.slane %v259, 4
        %v261 = vadd.f32 %v259, %v260
        %v262 = vrot.slane %v261, 2
        %v263 = vadd.f32 %v261, %v262
        %v264 = vrot.slane %v263, 1
        %v265 = vadd.f32 %v263, %v264
        %v266 = vadd.f32 %v250, %v252
        %v267 = vadd.f32 %v266, %v254
        %v268 = vadd.f32 %v267, %v256
        %v269 = vrot.slane %v268, 4
        %v270 = vadd.f32 %v268, %v269
        %v271 = vrot.slane %v270, 2
        %v272 = vadd.f32 %v270, %v271
        %v273 = vrot.slane %v272, 1
        %v274 = vadd.f32 %v272, %v273
        %v275 = vmul.f32 %v265, %v238
        %v276 = vmul.f32 %v274, %v238
        %v277 = vadd.f32 %v275, 1e-05
        %v278 = vadd.f32 %v276, 1e-05
        %v279 = vrsqrt.pop %v277
        %v280 = vrsqrt.pop %v278
        %v281 = vmul.f32 %v241, %v279
        %v282 = vmul.f32 %v242, %v280
        %v283 = vmul.f32 %v243, %v279
        %v284 = vmul.f32 %v244, %v280
        %v285 = vmul.f32 %v245, %v279
        %v286 = vmul.f32 %v246, %v280
        %v287 = vmul.f32 %v247, %v279
        %v288 = vmul.f32 %v248, %v280
        %v289 = vld [vmem:[%s1] sm:$0xff]
        %v290 = vld [vmem:[%s1 + $0x8] sm:$0xff]
        %v291 = vld [vmem:[%s1 + $0x10] sm:$0xff]
        %v292 = vld [vmem:[%s1 + $0x18] sm:$0xff]
        %v293 = vld [vmem:[%s2] sm:$0xff]
        %v294 = vld [vmem:[%s2 + $0x8] sm:$0xff]
        %v295 = vld [vmem:[%s2 + $0x10] sm:$0xff]
        %v296 = vld [vmem:[%s2 + $0x18] sm:$0xff]
        %298 = vset.pattern.permute.xlu0 0
        %299 = vperm.xlu0 %298, %v293
        %v300 = vpop.permute.xlu0 %299
        %303 = vset.pattern.permute.xlu0 0
        %304 = vperm.xlu0 %303, %v294
        %v305 = vpop.permute.xlu0 %304
        %308 = vset.pattern.permute.xlu0 0
        %309 = vperm.xlu0 %308, %v295
        %v310 = vpop.permute.xlu0 %309
        %313 = vset.pattern.permute.xlu0 0
        %314 = vperm.xlu0 %313, %v296
        %v315 = vpop.permute.xlu0 %314
        %vm317 = vcmask 261120
        %v319 = vsel %vm317, %v289, 0
        %v322 = vsel %vm317, %v290, 0
        %v325 = vsel %vm317, %v291, 0
        %v328 = vsel %vm317, %v292, 0
        %330 = vmatprep.subr.mxu0 0.0
        %331 = vmatpush1.msra.mxu0 0.0
        %332 = vmatprep.subr.mxu0 0.0
        %333 = vmatpush1.msra.mxu0 0.0
        %334 = vmatprep.subr.mxu0 0.0
        %335 = vmatpush1.msra.mxu0 0.0
        %336 = vmatprep.subr.mxu0 0.0
        %337 = vmatpush1.msra.mxu0 0.0
        %338 = vmatprep.subr.mxu0 0.0
        %339 = vmatpush1.msra.mxu0 0.0
        %340 = vmatprep.subr.mxu0 0.0
        %341 = vmatpush1.msra.mxu0 0.0
        %342 = vmatprep.subr.mxu0 0.0
        %343 = vmatpush1.msra.mxu0 0.0
        %344 = vmatprep.subr.mxu0 0.0
        %345 = vmatpush1.msra.mxu0 0.0
        %346 = vmatprep.subr.mxu0 0.0
        %347 = vmatpush1.msra.mxu0 0.0
        %348 = vmatprep.subr.mxu0 0.0
        %349 = vmatpush1.msra.mxu0 0.0
        %350 = vmatprep.subr.mxu0 0.0
        %351 = vmatpush1.msra.mxu0 0.0
        %352 = vmatprep.subr.mxu0 0.0
        %353 = vmatpush1.msra.mxu0 0.0
        %354 = vmatprep.subr.mxu0 %v288
        %355 = vmatpush1.msra.mxu0 %v287
        %356 = vmatprep.subr.mxu0 %v286
        %357 = vmatpush1.msra.mxu0 %v285
        %358 = vmatprep.subr.mxu0 %v284
        %359 = vmatpush1.msra.mxu0 %v283
        %360 = vmatprep.subr.mxu0 %v282
        %361 = vmatpush1.msra.mxu0 %v281
        %362 = vmatprep.subr.mxu0 0.0
        %363 = vmatpush2.msra.mxu0 0.0
        %364 = vmatprep.subr.mxu0 0.0
        %365 = vmatpush2.msra.mxu0 0.0
        %366 = vmatprep.subr.mxu0 0.0
        %367 = vmatpush2.msra.mxu0 0.0
        %368 = vmatprep.subr.mxu0 0.0
        %369 = vmatpush2.msra.mxu0 0.0
        %370 = vmatprep.subr.mxu0 0.0
        %371 = vmatpush2.msra.mxu0 0.0
        %372 = vmatprep.subr.mxu0 0.0
        %373 = vmatpush2.msra.mxu0 0.0
        %374 = vmatprep.subr.mxu0 0.0
        %375 = vmatpush2.msra.mxu0 0.0
        %376 = vmatprep.subr.mxu0 0.0
        %377 = vmatpush2.msra.mxu0 0.0
        %378 = vmatprep.subr.mxu0 0.0
        %379 = vmatpush2.msra.mxu0 0.0
        %380 = vmatprep.subr.mxu0 0.0
        %381 = vmatpush2.msra.mxu0 0.0
        %382 = vmatprep.subr.mxu0 0.0
        %383 = vmatpush2.msra.mxu0 0.0
        %384 = vmatprep.subr.mxu0 0.0
        %385 = vmatpush2.msra.mxu0 0.0
        %386 = vmatprep.subr.mxu0 0.0
        %387 = vmatpush2.msra.mxu0 0.0
        %388 = vmatprep.subr.mxu0 0.0
        %389 = vmatpush2.msra.mxu0 0.0
        %390 = vmatprep.subr.mxu0 0.0
        %391 = vmatpush2.msra.mxu0 0.0
        %392 = vmatprep.subr.mxu0 0.0
        %393 = vmatpush2.msra.mxu0 0.0
        %394 = vmatprep.mubr.f32.mxu0 0.0
        %395 = vmatmul.mubr.f32.gmra.mxu0 %v319
        %v396 = vpop.f32.mrf.mxu0
        %v397 = vadd.f32 %v300, %v396
        %v398 = vpop.f32.mrf.mxu0
        %v399 = vadd.f32 %v300, %v398
        %400 = vmatprep.mubr.f32.mxu0 0.0
        %401 = vmatmul.mubr.f32.gmra.mxu0 %v322
        %v402 = vpop.f32.mrf.mxu0
        %v403 = vadd.f32 %v305, %v402
        %v404 = vpop.f32.mrf.mxu0
        %v405 = vadd.f32 %v305, %v404
        %406 = vmatprep.mubr.f32.mxu0 0.0
        %407 = vmatmul.mubr.f32.gmra.mxu0 %v325
        %v408 = vpop.f32.mrf.mxu0
        %v409 = vadd.f32 %v310, %v408
        %v410 = vpop.f32.mrf.mxu0
        %v411 = vadd.f32 %v310, %v410
        %412 = vmatprep.mubr.f32.mxu0 0.0
        %413 = vmatmul.mubr.f32.gmra.mxu0 %v328
        %v414 = vpop.f32.mrf.mxu0
        %v415 = vadd.f32 %v315, %v414
        %v416 = vpop.f32.mrf.mxu0
        %v417 = vadd.f32 %v315, %v416
        %418 = vdwg.mxu0
        %v419 = vadd.f32 %v397, %v212
        %v420 = vadd.f32 %v399, %v213
        %v421 = vadd.f32 %v403, %v214
        %v422 = vadd.f32 %v405, %v215
        %v423 = vadd.f32 %v409, %v216
        %v424 = vadd.f32 %v411, %v217
        %v425 = vadd.f32 %v415, %v218
        %v426 = vadd.f32 %v417, %v219
        %427 = vst [vmem:[%s207] sm:$0xff] %v419
        %428 = vst [vmem:[%s207 + $0x8] sm:$0xff] %v420
        %429 = vst [vmem:[%s207 + $0x10] sm:$0xff] %v421
        %430 = vst [vmem:[%s207 + $0x18] sm:$0xff] %v422
        %431 = vst [vmem:[%s207 + $0x20] sm:$0xff] %v423
        %432 = vst [vmem:[%s207 + $0x28] sm:$0xff] %v424
        %433 = vst [vmem:[%s207 + $0x30] sm:$0xff] %v425
        %434 = vst [vmem:[%s207 + $0x38] sm:$0xff] %v426
        %s435 = sand.u32 %s112, 1
        %s436 = scalar_lea.sflag [#allocation4], %s435
        %s437 = sand.u32 %s112, 1
        %s438 = smul.addr %s437, 64
        %s439 = scalar_lea.vmem [#allocation5], %s438
        // Predicated region
        $region37: #{tpu_custom_call.1} parent=31 // pred_check
          %p440 = pneg %p122
        $region38: #{tpu_custom_call.1} parent=31 // pred_check_branch
          %442 = sbr.rel (%p440) target = $region40
        $region39: #{tpu_custom_call.1} parent=31 // pred_region
          %s443 = smul.u32 4, %s24
          %s444 = smul.u32 2, %s25
          %s446 = ssub.s32 1024, 1024
          %447 = vsyncadd %s436, %s446
          %s448 = smul.addr %s443, 2
          %s449 = sadd.s32 %s444, %s448
          %s450 = smul.addr %s449, 128
          %s451 = scalar_lea.hbm %s3, %s450
          %s452 = sshll.u32 %s439, 4
          %s453 = int_to_ptr.vmem [resolvable:$true] %s452
          %458 = dma.vmem_to_hbm [thread:$0]  %s453, 1024, %s451, %s436, 256, 256, 16
        $region40: #{tpu_custom_call.1} parent=31 // pred_fallthru
          _
      $region32: #{tpu_custom_call.1} parent=5 // pred_fallthru
        _
      %p459 = scmp.le.s32.totalorder 2, %s15
      // Predicated region
      $region41: #{tpu_custom_call.1} parent=5 // pred_check
        %p460 = pneg %p459
      $region42: #{tpu_custom_call.1} parent=5 // pred_check_branch
        %462 = sbr.rel (%p460) target = $region44
      $region43: #{tpu_custom_call.1} parent=5 // pred_region
        %s463 = ssub.s32 %s15, 2
        // Predicated region
        $region45: #{tpu_custom_call.1} parent=43 // pred_check
          %p464 = pneg %p128
        $region46: #{tpu_custom_call.1} parent=43 // pred_check_branch
          %466 = sbr.rel (%p464) target = $region48
        $region47: #{tpu_custom_call.1} parent=43 // pred_region
          %s467 = sand.u32 %s113, 1
          %s468 = scalar_lea.sflag [#allocation4], %s467
          %s469 = sand.u32 %s113, 1
          %s470 = smul.addr %s469, 64
          %s471 = scalar_lea.vmem [#allocation5], %s470
          %472 = dma.done %s468, 1024
        $region48: #{tpu_custom_call.1} parent=43 // pred_fallthru
          _
      $region44: #{tpu_custom_call.1} parent=5 // pred_fallthru
        _
    $region6: #{tpu_custom_call.1} parent=1 // loop_footer
      %s19 = sadd.s32 1, %s15
    $region7: #{tpu_custom_call.1} parent=1 // loop_footer_branch
      %14 = sbr.rel target = $region3
    $region8: #{tpu_custom_call.1} parent=1 // loop_exit
      _
    %473 = vsyncpa [#allocation3], 1
    %s474 = scalar_lea.sflag [#allocation3], 1
    %475 = vsyncpa %s474, 1
    %476 = vsyncpa [#allocation4], 1
    %s477 = scalar_lea.sflag [#allocation4], 1
    %478 = vsyncpa %s477, 1

</llo_original>
